<compile_context>
chip_gen: v7x
topology: tpu7x:2x2x1
jax: 0.10.0
libtpu: 0.0.40
codegen_flags: <defaults>
</compile_context>

<pallas_src>
import functools

import jax
import jax.numpy as jnp
from jax import lax
from jax.experimental import pallas as pl
from jax.experimental.pallas import tpu as pltpu


_VMEM = pl.BlockSpec(memory_space=pltpu.MemorySpace.VMEM)

# Contract the last axis of both operands: A (m,k) x B (n,k) -> (m,n).
# Feeds the MXU directly -- no in-kernel .T / XLU relayout.
_CONTRACT_LAST = (((1,), (1,)), ((), ()))


def _dotT(a, b):
    return lax.dot_general(a, b, _CONTRACT_LAST,
                           preferred_element_type=jnp.float32)


# ---------------------------------------------------------------------------
# one-shot prep kernels (class independent, computed once)
# ---------------------------------------------------------------------------
def _proj_kernel(x_ref, wproj_ref, o_ref):
    # input_rep = x @ W_proj^T   (nn.Linear, bias=False)
    o_ref[...] = _dotT(x_ref[...], wproj_ref[...])                      # (B, HL) f32


def _mlp_prep_kernel(x_ref, wproj_ref, w1a_ref, b1_ref, o_ref):
    # a_part = (x @ W_proj^T) @ W1a^T + b1 : the class-independent half of the
    # first MLP layer.  b1 is folded in here so the per-tile kernel skips one
    # full (B, TILE_C, h1) bias pass.
    proj = _dotT(x_ref[...], wproj_ref[...])                            # (B, HL) f32
    o_ref[...] = _dotT(proj.astype(jnp.bfloat16), w1a_ref[...]) + b1_ref[...]


# ---------------------------------------------------------------------------
# per-class-tile kernels (grid over the class dimension)
# ---------------------------------------------------------------------------
def _base_tile_kernel(proj_ref, lab_ref, o_ref, *, inv_ndesc):
    # label tile arrives pre-reshaped (TILE_C, D, H); mean over D is a cheap
    # sublane-axis scaled sum in f32, MXU operands bf16, accumulation f32.
    lab = lab_ref[...].astype(jnp.float32)                              # (TILE_C, D, H)
    lab_agg = (jnp.sum(lab, axis=1) * inv_ndesc).astype(jnp.bfloat16)   # (TILE_C, H)
    # logits tile = input_rep @ label_rep^T  -> lane-dense (B, TILE_C)
    o_ref[...] = _dotT(proj_ref[...], lab_agg)


def _mlp_tile_kernel(a_ref, lab_ref, w1b_ref, w2_ref, b2_ref, w3_ref, b3_ref,
                     o_ref, *, inv_ndesc, batch):
    lab = lab_ref[...].astype(jnp.float32)                              # (TILE_C, D, H)
    lab_agg = (jnp.sum(lab, axis=1) * inv_ndesc).astype(jnp.bfloat16)   # (TILE_C, H)
    # class-dependent half of layer 1 (shared across the whole batch)
    l_part = _dotT(lab_agg, w1b_ref[...])                               # (TILE_C, h1) f32

    a_part = a_ref[...]          # (B, h1)  f32, b1 already folded in
    w2 = w2_ref[...]             # (h2, h1) bf16
    b2 = b2_ref[...]             # (1, h2)  f32
    w3 = w3_ref[...]             # (1, h2)  f32
    b3 = b3_ref[...]             # (1, 1)   f32

    rows = []
    for b in range(batch):       # static unroll over the (small) batch:
        # keeps every matmul 2-D -> no (B*TILE_C, h1) reshape copy in VMEM
        h1b = jnp.maximum(l_part + a_part[b:b + 1, :], 0.0)             # (TILE_C, h1)
        h2b = _dotT(h1b.astype(jnp.bfloat16), w2) + b2                  # (TILE_C, h2)
        h2b = jnp.maximum(h2b, 0.0)
        # width-1 output linear as (1,h2) x (TILE_C,h2)^T -> lane-dense (1, TILE_C)
        rows.append(_dotT(w3, h2b))
    o_ref[...] = jnp.concatenate(rows, axis=0) + b3                     # (B, TILE_C)


# ---------------------------------------------------------------------------
# wrappers
# ---------------------------------------------------------------------------
def _pad_and_tile_labels(label_pooler, n_desc, max_tile_c):
    """(C*D, H) -> padded (C_pad, D, H) plus (C, C_pad, tile_c)."""
    CD, H = label_pooler.shape
    C = CD // n_desc
    lab = label_pooler.reshape(C, n_desc, H)     # free metadata reshape (wrapper side)
    if C <= max_tile_c:
        return lab, C, C, C
    c_pad = ((C + max_tile_c - 1) // max_tile_c) * max_tile_c
    if c_pad != C:
        lab = jnp.pad(lab, ((0, c_pad - C), (0, 0), (0, 0)))
    return lab, C, c_pad, max_tile_c


def bert_semsup_base(input_pooler, w_proj, label_pooler, *, n_desc, max_tile_c=128):
    B, H = input_pooler.shape
    HL = w_proj.shape[0]
    lab, C, c_pad, tile_c = _pad_and_tile_labels(label_pooler, n_desc, max_tile_c)

    # 1) class-independent projection, computed once
    proj = pl.pallas_call(
        _proj_kernel,
        out_shape=jax.ShapeDtypeStruct((B, HL), jnp.float32),
        in_specs=[_VMEM, _VMEM],
        out_specs=_VMEM,
    )(input_pooler.astype(jnp.bfloat16), w_proj.astype(jnp.bfloat16))

    # 2) logits, tiled over the class dimension
    kernel = functools.partial(_base_tile_kernel, inv_ndesc=1.0 / n_desc)
    cost = pl.CostEstimate(
        flops=2 * B * c_pad * HL + c_pad * n_desc * H,
        transcendentals=0,
        bytes_accessed=lab.size * 2 + B * HL * 2 + B * c_pad * 4,
    )
    logits = pl.pallas_call(
        kernel,
        grid=(c_pad // tile_c,),
        out_shape=jax.ShapeDtypeStruct((B, c_pad), jnp.float32),
        in_specs=[
            pl.BlockSpec((B, HL), lambda c: (0, 0)),                 # proj (resident)
            pl.BlockSpec((tile_c, n_desc, H), lambda c: (c, 0, 0)),  # label tile
        ],
        out_specs=pl.BlockSpec((B, tile_c), lambda c: (0, c)),
        compiler_params=pltpu.CompilerParams(dimension_semantics=("parallel",)),
        cost_estimate=cost,
    )(proj.astype(jnp.bfloat16), lab.astype(jnp.bfloat16))
    return logits[:, :C]


def bert_semsup_mlp(input_pooler, w_proj, label_pooler,
                    w1, b1, w2, b2, w3, b3, *, n_desc, max_tile_c=128):
    B, H = input_pooler.shape
    HL = w_proj.shape[0]
    h1_dim = w1.shape[0]
    h2_dim = w2.shape[0]
    lab, C, c_pad, tile_c = _pad_and_tile_labels(label_pooler, n_desc, max_tile_c)

    # Split W1 into the half acting on input_rep and the half acting on
    # label_rep, so the (B, C, 2*HL) concat tensor is never materialised.
    w1a = w1[:, :HL].astype(jnp.bfloat16)
    w1b = w1[:, HL:].astype(jnp.bfloat16)

    # 1) class-independent prep (projection + input half of layer 1, b1 folded)
    a_part = pl.pallas_call(
        _mlp_prep_kernel,
        out_shape=jax.ShapeDtypeStruct((B, h1_dim), jnp.float32),
        in_specs=[_VMEM, _VMEM, _VMEM, _VMEM],
        out_specs=_VMEM,
    )(input_pooler.astype(jnp.bfloat16), w_proj.astype(jnp.bfloat16),
      w1a, b1.reshape(1, h1_dim).astype(jnp.float32))

    # 2) score head, tiled over the class dimension
    kernel = functools.partial(_mlp_tile_kernel, inv_ndesc=1.0 / n_desc, batch=B)
    flops = (2 * c_pad * HL * h1_dim
             + B * (2 * c_pad * h1_dim * h2_dim + 4 * c_pad * h2_dim
                    + 2 * c_pad * h1_dim))
    bytes_acc = (lab.size * 2 + B * h1_dim * 4
                 + (h1_dim * HL + h2_dim * h1_dim) * 2 + B * c_pad * 4)
    logits = pl.pallas_call(
        kernel,
        grid=(c_pad // tile_c,),
        out_shape=jax.ShapeDtypeStruct((B, c_pad), jnp.float32),
        in_specs=[
            pl.BlockSpec((B, h1_dim), lambda c: (0, 0)),             # a_part (resident)
            pl.BlockSpec((tile_c, n_desc, H), lambda c: (c, 0, 0)),  # label tile
            pl.BlockSpec((h1_dim, HL), lambda c: (0, 0)),            # W1b
            pl.BlockSpec((h2_dim, h1_dim), lambda c: (0, 0)),        # W2
            pl.BlockSpec((1, h2_dim), lambda c: (0, 0)),             # b2
            pl.BlockSpec((1, h2_dim), lambda c: (0, 0)),             # W3
            pl.BlockSpec((1, 1), lambda c: (0, 0)),                  # b3
        ],
        out_specs=pl.BlockSpec((B, tile_c), lambda c: (0, c)),
        compiler_params=pltpu.CompilerParams(dimension_semantics=("parallel",)),
        cost_estimate=pl.CostEstimate(flops=flops, transcendentals=0,
                                      bytes_accessed=bytes_acc),
    )(a_part, lab.astype(jnp.bfloat16), w1b, w2.astype(jnp.bfloat16),
      b2.reshape(1, h2_dim).astype(jnp.float32),
      w3.reshape(1, h2_dim).astype(jnp.float32),
      b3.reshape(1, 1).astype(jnp.float32))
    return logits[:, :C]


# ---------------------------------------------------------------------------
# pure-JAX f32 reference (mirrors the PyTorch forward exactly)
# ---------------------------------------------------------------------------
def ref_forward(input_pooler, w_proj, label_pooler, *, n_desc, mlp_params=None):
    B, H = input_pooler.shape
    input_rep = input_pooler @ w_proj.T
    label_rep = label_pooler.reshape(-1, n_desc, H).mean(axis=1)          # mean agg
    label_rep_t = label_rep.T                                             # (H, C)
    if mlp_params is None:
        return input_rep @ label_rep_t
    w1, b1, w2, b2, w3, b3 = mlp_params
    C = label_rep_t.shape[1]
    inp_rep_repeat = jnp.repeat(input_rep[:, None, :], C, axis=1)         # (B,C,H)
    lab_rep_repeat = jnp.repeat(label_rep_t.T[None, :, :], B, axis=0)     # (B,C,H)
    combine = jnp.concatenate([inp_rep_repeat, lab_rep_repeat], axis=2)
    combine = combine.reshape(-1, 2 * H)
    h = jnp.maximum(combine @ w1.T + b1, 0.0)
    h = jnp.maximum(h @ w2.T + b2, 0.0)
    out = h @ w3.T + b3
    return out.reshape(B, -1)


if __name__ == "__main__":
    def run_case(case_id, B, H, C, D, H1, H2):
        HL = H   # mean aggregation => label_model_hidden == hidden_size
        k = jax.random.split(jax.random.fold_in(jax.random.PRNGKey(0), case_id), 10)

        # synthetic pooler outputs of the (external) BERT encoders
        input_pooler = jax.random.normal(k[0], (B, H), jnp.float32)
        label_pooler = jax.random.normal(k[1], (C * D, H), jnp.float32)

        # deterministic parameters (PyTorch (out, in) weight convention)
        w_proj = jax.random.normal(k[2], (HL, H), jnp.float32) * 0.1
        w1 = jax.random.normal(k[3], (H1, 2 * HL), jnp.float32) * 0.1
        b1 = jax.random.normal(k[4], (H1,), jnp.float32) * 0.1
        w2 = jax.random.normal(k[5], (H2, H1), jnp.float32) * 0.1
        b2 = jax.random.normal(k[6], (H2,), jnp.float32) * 0.1
        w3 = jax.random.normal(k[7], (1, H2), jnp.float32) * 0.1
        b3 = jax.random.normal(k[8], (1,), jnp.float32) * 0.1

        # --- score_function == 'base' ---
        out_b = jax.block_until_ready(
            bert_semsup_base(input_pooler, w_proj, label_pooler, n_desc=D))
        ref_b = ref_forward(input_pooler, w_proj, label_pooler, n_desc=D)
        assert out_b.shape == (B, C)
        # bf16 MXU operands -> tolerances vs the f32 reference are loosened.
        assert jnp.allclose(out_b, ref_b, atol=2e-1, rtol=5e-2), \
            float(jnp.max(jnp.abs(out_b - ref_b)))

        # --- score_function == 'mlp' ---
        out_m = jax.block_until_ready(
            bert_semsup_mlp(input_pooler, w_proj, label_pooler,
                            w1, b1, w2, b2, w3, b3, n_desc=D))
        ref_m = ref_forward(input_pooler, w_proj, label_pooler, n_desc=D,
                            mlp_params=(w1, b1, w2, b2, w3, b3))
        assert out_m.shape == (B, C)
        assert jnp.allclose(out_m, ref_m, atol=5e-2, rtol=5e-2), \
            float(jnp.max(jnp.abs(out_m - ref_m)))

    # single-tile case (C <= 128)
    run_case(0, B=8, H=32, C=16, D=2, H1=64, H2=32)
    # multi-tile case: exercises the class-dimension grid + padding
    # (C=160 -> padded to 256, 2 parallel tiles of 128)
    run_case(1, B=8, H=32, C=160, D=2, H1=64, H2=32)

    print("KERNEL_OK")
</pallas_src>

<mosaic_0001>
module attributes {stable_mosaic.version = 11 : i64} {
  func.func @_proj_kernel(%arg0: memref<8x32xbf16, #tpu.memory_space<vmem>>, %arg1: memref<32x32xbf16, #tpu.memory_space<vmem>>, %arg2: memref<8x32xf32, #tpu.memory_space<vmem>>) attributes {dimension_semantics = [], scalar_prefetch = 0 : i64, scratch_operands = 0 : i64, tpu.core_type = #tpu.core_type<tc>} {
    %c0 = arith.constant 0 : index
    %c0_0 = arith.constant 0 : index
    %0 = vector.load %arg0[%c0, %c0_0] : memref<8x32xbf16, #tpu.memory_space<vmem>>, vector<8x32xbf16>
    %c0_1 = arith.constant 0 : index
    %c0_2 = arith.constant 0 : index
    %1 = vector.load %arg1[%c0_1, %c0_2] : memref<32x32xbf16, #tpu.memory_space<vmem>>, vector<32x32xbf16>
    %cst = arith.constant dense<0.000000e+00> : vector<8x32xf32>
    %2 = tpu.matmul %0, %1, %cst {dimension_numbers = #tpu.dot_dimension_numbers<[1], [1], [0], [0], [0, 0, 1, 0], [], []>} : vector<8x32xbf16>, vector<32x32xbf16>, vector<8x32xf32> -> vector<8x32xf32>
    %c0_3 = arith.constant 0 : index
    %c0_4 = arith.constant 0 : index
    %3 = vector.load %arg2[%c0_3, %c0_4] : memref<8x32xf32, #tpu.memory_space<vmem>>, vector<8x32xf32>
    tpu.vector_store %arg2[%c0_3, %c0_4], %2 {strides = array<i32>} : memref<8x32xf32, #tpu.memory_space<vmem>>, vector<8x32xf32>,
    return
  }
}

</mosaic_0001>

<llo_original>
// kernel: tpu_custom_call.1
$region0: #{tpu_custom_call.1}
  #allocation0 [shape = 'u32[]', space=smem, size = 0x4, offset = 0x4, fixed_abs, tag = 'smem constant byte address 0x4 - core index']
  #allocation1 [shape = 'u32[144,128]{1,0:T(1,128)}', space=vmem, size = 0x12000, scoped, tag = 'internal scratch']
  %s0 = inlined_call_operand.hbm [shape: bf16[8,32], index: 0, kind: input, shape index: {}]
  %s1 = inlined_call_operand.hbm [shape: bf16[32,32], index: 1, kind: input, shape index: {}]
  %s2 = inlined_call_operand.hbm [shape: f32[8,32], index: 2, kind: output, shape index: {}]
  %s3 = sld [smem:[#allocation0]]
  $region26: #{tpu_custom_call.1} parent=0
    _
  %s5 = ssub.s32 1, %s3
  %s6 = scalar_select 0, %s5, %s3
  $region1: #{tpu_custom_call.1} parent=0
    #allocation2 [shape = 'u8[2048]{0}', space=vmem, size = 0x800, scoped, tag = 'input window, operand 0, single buffered']
    #allocation3 [shape = 's32[1]{0}', space=sflag, size = 0x4, scoped, tag = 'scoped memory for tpu_custom_call.1']
    #allocation4 [shape = 's32[1]{0}', space=sflag, size = 0x4, scoped, tag = 'scoped memory for tpu_custom_call.1']
    #allocation5 [shape = 'u8[8192]{0}', space=vmem, size = 0x2000, scoped, tag = 'input window, operand 1, single buffered']
    #allocation6 [shape = 's32[1]{0}', space=sflag, size = 0x4, scoped, tag = 'scoped memory for tpu_custom_call.1']
    #allocation7 [shape = 'u8[4096]{0}', space=vmem, size = 0x1000, scoped, tag = 'output window, operand 0, single buffered']
    %7 = vsyncpa [#allocation3], 0
    %8 = vsyncpa [#allocation6], 0
    %9 = vsyncpa [#allocation4], 0
    // Predicated region
    $region2: #{tpu_custom_call.1} parent=1 // pred_check
      _
    $region3: #{tpu_custom_call.1} parent=1 // pred_check_branch
      %11 = sbr.rel (0) target = $region5
    $region4: #{tpu_custom_call.1} parent=1 // pred_region
      %s13 = ssub.s32 64, 64
      %14 = vsyncadd [#allocation3], %s13
      %s16 = sshll.u32 [#allocation2], 4
      %s17 = int_to_ptr.vmem [resolvable:$true] %s16
      %19 = dma.hbm_to_vmem [thread:$0]  %s0, 64, %s17, [#allocation3]
    $region5: #{tpu_custom_call.1} parent=1 // pred_fallthru
      _
    // Predicated region
    $region6: #{tpu_custom_call.1} parent=1 // pred_check
      _
    $region7: #{tpu_custom_call.1} parent=1 // pred_check_branch
      %21 = sbr.rel (0) target = $region9
    $region8: #{tpu_custom_call.1} parent=1 // pred_region
      %s23 = ssub.s32 256, 256
      %24 = vsyncadd [#allocation6], %s23
      %s25 = sshll.u32 [#allocation5], 4
      %s26 = int_to_ptr.vmem [resolvable:$true] %s25
      %31 = dma.hbm_to_vmem [thread:$0]  %s1, 256, %s26, [#allocation6], 64, 64, 4
    $region9: #{tpu_custom_call.1} parent=1 // pred_fallthru
      _
    // Predicated region
    $region10: #{tpu_custom_call.1} parent=1 // pred_check
      _
    $region11: #{tpu_custom_call.1} parent=1 // pred_check_branch
      %33 = sbr.rel (0) target = $region13
    $region12: #{tpu_custom_call.1} parent=1 // pred_region
      %34 = dma.done [#allocation3], 64
    $region13: #{tpu_custom_call.1} parent=1 // pred_fallthru
      _
    // Predicated region
    $region14: #{tpu_custom_call.1} parent=1 // pred_check
      _
    $region15: #{tpu_custom_call.1} parent=1 // pred_check_branch
      %36 = sbr.rel (0) target = $region17
    $region16: #{tpu_custom_call.1} parent=1 // pred_region
      %37 = dma.done [#allocation6], 256
    $region17: #{tpu_custom_call.1} parent=1 // pred_fallthru
      _
    %v39 = vld [vmem:[#allocation2] sm:$0xf]
    %v40 = vld [vmem:[#allocation5] sm:$0xf]
    %v41 = vld [vmem:[#allocation5 + $0x4] sm:$0xf]
    %v42 = vld [vmem:[#allocation5 + $0x8] sm:$0xf]
    %v43 = vld [vmem:[#allocation5 + $0xc] sm:$0xf]
    %v48 = vunpack.c.l.b16 %v40
    %v49 = vunpack.c.l.b16 %v41
    %v50 = vunpack.c.l.b16 %v42
    %v51 = vunpack.c.l.b16 %v43
    %v52 = vpack.c.b16 %v49, %v48
    %v53 = vpack.c.b16 %v51, %v50
    %vm54 = vcmask 261120
    %v56 = vsel %vm54, %v39, 0
    %v59 = vsel %vm54, %v52, 0
    %v62 = vsel %vm54, %v53, 0
    %64 = vmatprep.subr.bf16.mxu0 0
    %65 = vmatpush1.bf16.xpose.msra.mxu0 %v59
    %66 = vmatprep.subr.bf16.mxu0 0
    %67 = vmatpush1.bf16.xpose.msra.mxu0 %v62
    %68 = vmatprep.subr.bf16.mxu0 0
    %69 = vmatpush1.bf16.xpose.msra.mxu0 0
    %70 = vmatprep.subr.bf16.mxu0 0
    %71 = vmatpush1.bf16.xpose.msra.mxu0 0
    %72 = vmatprep.subr.bf16.mxu0 0
    %73 = vmatpush1.bf16.xpose.msra.mxu0 0
    %74 = vmatprep.subr.bf16.mxu0 0
    %75 = vmatpush1.bf16.xpose.msra.mxu0 0
    %76 = vmatprep.subr.bf16.mxu0 0
    %77 = vmatpush1.bf16.xpose.msra.mxu0 0
    %78 = vmatprep.subr.bf16.mxu0 0
    %79 = vmatpush1.bf16.xpose.msra.mxu0 0
    %80 = vmatprep.subr.bf16.mxu0 0
    %81 = vmatpush1.bf16.xpose.msra.mxu0 0
    %82 = vmatprep.subr.bf16.mxu0 0
    %83 = vmatpush1.bf16.xpose.msra.mxu0 0
    %84 = vmatprep.subr.bf16.mxu0 0
    %85 = vmatpush1.bf16.xpose.msra.mxu0 0
    %86 = vmatprep.subr.bf16.mxu0 0
    %87 = vmatpush1.bf16.xpose.msra.mxu0 0
    %88 = vmatprep.subr.bf16.mxu0 0
    %89 = vmatpush1.bf16.xpose.msra.mxu0 0
    %90 = vmatprep.subr.bf16.mxu0 0
    %91 = vmatpush1.bf16.xpose.msra.mxu0 0
    %92 = vmatprep.subr.bf16.mxu0 0
    %93 = vmatpush1.bf16.xpose.msra.mxu0 0
    %94 = vmatprep.subr.bf16.mxu0 0
    %95 = vmatpush1.bf16.xpose.msra.mxu0 0
    %96 = vmatprep.mubr.bf16.mxu0 0
    %97 = vmatmul.mubr.bf16.gmra.mrb[0].mxu0 %v56
    %v98 = vpop.f32.mrb[0].mxu0
    %v99 = vadd.f32 0.0, %v98
    %v100 = vpop.f32.mrb[0].mxu0
    %v101 = vpop.f32.mrb[0].mxu0
    %v102 = vpop.f32.mrb[0].mxu0
    %103 = vdwg.mxu0
    %104 = vst.msk [vmem:[#allocation7] sm:$0xff] %vm54, %v99
    // Predicated region
    $region18: #{tpu_custom_call.1} parent=1 // pred_check
      _
    $region19: #{tpu_custom_call.1} parent=1 // pred_check_branch
      %106 = sbr.rel (0) target = $region21
    $region20: #{tpu_custom_call.1} parent=1 // pred_region
      %s108 = ssub.s32 128, 128
      %109 = vsyncadd [#allocation4], %s108
      %s111 = sshll.u32 [#allocation7], 4
      %s112 = int_to_ptr.vmem [resolvable:$true] %s111
      %114 = dma.vmem_to_hbm [thread:$0]  %s112, 128, %s2, [#allocation4]
    $region21: #{tpu_custom_call.1} parent=1 // pred_fallthru
      _
    // Predicated region
    $region22: #{tpu_custom_call.1} parent=1 // pred_check
      _
    $region23: #{tpu_custom_call.1} parent=1 // pred_check_branch
      %116 = sbr.rel (0) target = $region25
    $region24: #{tpu_custom_call.1} parent=1 // pred_region
      %117 = dma.done [#allocation4], 128
    $region25: #{tpu_custom_call.1} parent=1 // pred_fallthru
      _
    %118 = vsyncpa [#allocation3], 1
    %119 = vsyncpa [#allocation6], 1
    %120 = vsyncpa [#allocation4], 1

</llo_original>
